<compile_context>
chip_gen: v5e
topology: v5e:2x2
jax: 0.10.0
libtpu: 0.0.40
codegen_flags: <defaults>
</compile_context>

<pallas_src>
import jax
import jax.numpy as jnp
import numpy as np
from jax.experimental import pallas as pl
from jax.experimental.pallas import tpu as pltpu


def _round_up(n, m):
    return ((n + m - 1) // m) * m


def _sigmoid(x):
    # numerically-stable sigmoid; tanh goes to the EUP slot (free next to MXU work)
    return 0.5 * (jnp.tanh(0.5 * x) + 1.0)


def tyc_3dgcn_kernel(
    x_sum_ref, x_src_ref, v_stk_ref, r_stk_ref, egid_ref,
    w_s_ref, b_s_ref, w_sv_ref, w_vv_ref, b_v_ref,
    w_es_ref, b_es_ref, w_ev_ref, b_ev_ref,
    w1_ref, b1_ref, w2_ref, b2_ref,
    out_ref,
):
    E = x_sum_ref.shape[0]          # padded edge count (multiple of 8)
    Bp = out_ref.shape[0]           # padded graph count (multiple of 8)

    x_sum = x_sum_ref[...]          # [E, Fp]   x_src + x_dst
    x_src = x_src_ref[...]          # [E, Fp]
    v_stk = v_stk_ref[...]          # [3E, Fp]  component-major stacked vector feats
    r_stk = r_stk_ref[...]          # [3E, 1]   matching relative-position components

    # ---- tyc_3DGCN_Block -----------------------------------------------------
    # TODO(synk): tyc_3DGCN_Block is not defined in the reference source; this is
    # a shape-faithful 3DGCN-style scalar/vector message block (scalar<->vector
    # coupling via the relative-position vector r).
    vr = v_stk * r_stk                                       # [3E, Fp]
    vdr = vr[0:E] + vr[E:2 * E] + vr[2 * E:3 * E]            # [E, Fp]  = sum_k v_k * r_k

    # scalar message: single fused matmul [E, 2Fp] @ [2Fp, Fp] (w_ss|w_vs stacked)
    s_in = jnp.concatenate([x_sum, vdr], axis=1)
    h_s = jnp.maximum(
        jnp.dot(s_in, w_s_ref[...], preferred_element_type=jnp.float32) + b_s_ref[...],
        0.0)                                                 # [E, Fp]

    # vector message: ONE matmul over the stacked [3E, Fp] slab
    sv = jnp.dot(x_src, w_sv_ref[...], preferred_element_type=jnp.float32)   # [E, Fp]
    sv_stk = jnp.concatenate([sv, sv, sv], axis=0)                           # [3E, Fp]
    h_v = jnp.maximum(
        jnp.dot(v_stk, w_vv_ref[...], preferred_element_type=jnp.float32)
        + r_stk * sv_stk + b_v_ref[...],
        0.0)                                                 # [3E, Fp]

    # ---- edge gates: Linear(F,1)+Sigmoid as VPU multiply + lane reduce --------
    g_s = _sigmoid(jnp.sum(h_s * w_es_ref[...], axis=-1, keepdims=True) + b_es_ref[...])
    g_v = _sigmoid(jnp.sum(h_v * w_ev_ref[...], axis=-1, keepdims=True) + b_ev_ref[...])

    ws = g_s * h_s                                           # [E, Fp]
    wv = g_v * h_v                                           # [3E, Fp]

    # lane-stack [scalar | vx | vy | vz] -> [E, 4Fp] (= 128 lanes for Fp = 32)
    readout_in = jnp.concatenate(
        [ws, wv[0:E], wv[E:2 * E], wv[2 * E:3 * E]], axis=1)

    # ---- per-graph weighted edge sums (dgl.sum_edges) via in-kernel one-hot ---
    ids = egid_ref[...]                                      # [1, E] int32
    rows = jax.lax.broadcasted_iota(jnp.int32, (Bp, E), 0)
    onehot = (rows == ids).astype(jnp.float32)               # [Bp, E]
    readout = jnp.dot(onehot, readout_in,
                      preferred_element_type=jnp.float32)    # [Bp, 4Fp]

    # ---- readout MLPs + head (dropout p=0 -> identity); w1 is block-diagonal --
    hidden = jnp.maximum(
        jnp.dot(readout, w1_ref[...], preferred_element_type=jnp.float32) + b1_ref[...],
        0.0)                                                 # [Bp, 2H] = [s_h | v_h]
    out_ref[...] = (jnp.dot(hidden, w2_ref[...], preferred_element_type=jnp.float32)
                    + b2_ref[...])                           # [Bp, OUT_PAD]


def tyc_3dgcn_core_forward(params, x, v, pos, src, dst, edge_graph_id, num_graphs):
    """Regression-mode forward of tyc_3DGCN_Core on a batched graph."""
    N, F = x.shape
    E = src.shape[0]
    B = num_graphs
    H = params["w1s"].shape[1]
    OUT = params["w2"].shape[1]
    f32 = jnp.float32

    F_PAD = max(32, _round_up(F, 8))
    E_PAD = _round_up(E, 8)
    B_PAD = max(8, _round_up(B, 8))
    OUT_PAD = max(128, _round_up(OUT, 128))

    # --- glue: edge gathers + geometry (kept in XLA; see TODO at top of file) ---
    x_src = x[src]
    x_dst = x[dst]
    v_src = v[src]                                  # [E, 3, F]
    r = pos[dst] - pos[src]                         # [E, 3]

    dE, dF = E_PAD - E, F_PAD - F
    x_sum_p = jnp.pad((x_src + x_dst).astype(f32), ((0, dE), (0, dF)))
    x_src_p = jnp.pad(x_src.astype(f32), ((0, dE), (0, dF)))
    v_p = jnp.pad(v_src.astype(f32), ((0, dE), (0, 0), (0, dF)))
    v_stk = jnp.transpose(v_p, (1, 0, 2)).reshape(3 * E_PAD, F_PAD)
    r_p = jnp.pad(r.astype(f32), ((0, dE), (0, 0)))
    r_stk = jnp.transpose(r_p, (1, 0)).reshape(3 * E_PAD, 1)
    egid = jnp.pad(edge_graph_id.astype(jnp.int32), (0, dE), constant_values=-1)
    egid = egid.reshape(1, E_PAD)

    def pad2(a, rows, cols):
        a = a.astype(f32)
        return jnp.pad(a, ((0, rows - a.shape[0]), (0, cols - a.shape[1])))

    # --- fused / padded weights (built once per call; tiny) ---------------------
    w_scalar = jnp.zeros((2 * F_PAD, F_PAD), f32)            # [w_ss ; w_vs]
    w_scalar = w_scalar.at[0:F, 0:F].set(params["w_ss"])
    w_scalar = w_scalar.at[F_PAD:F_PAD + F, 0:F].set(params["w_vs"])
    b_s = pad2(params["b_s"], 1, F_PAD)
    w_sv = pad2(params["w_sv"], F_PAD, F_PAD)
    w_vv = pad2(params["w_vv"], F_PAD, F_PAD)
    b_v = pad2(params["b_v"], 1, F_PAD)
    w_es = pad2(params["w_es"].T, 1, F_PAD)                  # gate weight as a row
    w_ev = pad2(params["w_ev"].T, 1, F_PAD)
    b_es = params["b_es"].astype(f32)                        # [1, 1]
    b_ev = params["b_ev"].astype(f32)                        # [1, 1]

    # block-diagonal [4F_PAD, 2H]: [scalar | vx | vy | vz] -> [s_h | v_h]
    w1_big = jnp.zeros((4 * F_PAD, 2 * H), f32)
    w1_big = w1_big.at[0:F, 0:H].set(params["w1s"])
    for k in range(3):
        w1_big = w1_big.at[(k + 1) * F_PAD:(k + 1) * F_PAD + F, H:2 * H].set(
            params["w1v"][k * F:(k + 1) * F, :])
    b1_big = jnp.concatenate([params["b1s"], params["b1v"]], axis=1).astype(f32)

    w2 = pad2(params["w2"], 2 * H, OUT_PAD)
    b2 = pad2(params["b2"], 1, OUT_PAD)

    inputs = [x_sum_p, x_src_p, v_stk, r_stk, egid,
              w_scalar, b_s, w_sv, w_vv, b_v,
              w_es, b_es, w_ev, b_ev,
              w1_big, b1_big, w2, b2]

    flops = 2 * (E_PAD * (2 * F_PAD) * F_PAD        # scalar message
                 + E_PAD * F_PAD * F_PAD            # sv
                 + 3 * E_PAD * F_PAD * F_PAD        # vector message
                 + B_PAD * E_PAD * 4 * F_PAD        # readout
                 + B_PAD * 4 * F_PAD * 2 * H        # fused MLPs
                 + B_PAD * 2 * H * OUT_PAD)         # head
    bytes_accessed = sum(int(np.prod(a.shape)) * a.dtype.itemsize for a in inputs)
    bytes_accessed += B_PAD * OUT_PAD * 4

    out_pad = pl.pallas_call(
        tyc_3dgcn_kernel,
        out_shape=jax.ShapeDtypeStruct((B_PAD, OUT_PAD), f32),
        in_specs=[pl.BlockSpec(memory_space=pltpu.MemorySpace.VMEM)] * len(inputs),
        out_specs=pl.BlockSpec(memory_space=pltpu.MemorySpace.VMEM),
        cost_estimate=pl.CostEstimate(
            flops=flops, transcendentals=4 * E_PAD, bytes_accessed=bytes_accessed),
    )(*inputs)

    return out_pad[:B, :OUT]


def reference_forward(params, x, v, pos, src, dst, edge_graph_id, num_graphs):
    """Pure-JAX reference implementing identical math."""
    B = num_graphs
    F = x.shape[1]
    x_src, x_dst = x[src], x[dst]
    v_src = v[src]
    pos_src, pos_dst = pos[src], pos[dst]
    r = pos_dst - pos_src                                        # [E, 3]

    v_dot_r = jnp.sum(v_src * r[:, :, None], axis=1)             # [E, F]
    h_s = jax.nn.relu((x_src + x_dst) @ params["w_ss"]
                      + v_dot_r @ params["w_vs"] + params["b_s"])
    sv = x_src @ params["w_sv"]
    h_v = jax.nn.relu(v_src @ params["w_vv"] + r[:, :, None] * sv[:, None, :]
                      + params["b_v"][None])                     # [E, 3, F]

    w_s = jax.nn.sigmoid(h_s @ params["w_es"] + params["b_es"])  # [E, 1]
    w_v = jax.nn.sigmoid(h_v @ params["w_ev"] + params["b_ev"])  # [E, 3, 1]

    onehot = (edge_graph_id[None, :] == jnp.arange(B)[:, None]).astype(jnp.float32)
    scalar_readout = onehot @ (w_s * h_s)                        # [B, F]
    vec_readout = jnp.einsum("be,ekf->bkf", onehot, w_v * h_v)   # [B, 3, F]

    s_h = jax.nn.relu(scalar_readout @ params["w1s"] + params["b1s"])
    v_h = jax.nn.relu(vec_readout.reshape(B, 3 * F) @ params["w1v"] + params["b1v"])
    return jnp.concatenate([s_h, v_h], axis=1) @ params["w2"] + params["b2"]


def init_params(key, F, H, out_size):
    ks = jax.random.split(key, 12)
    s = 0.1

    def w(k, shape):
        return (s * jax.random.normal(k, shape)).astype(jnp.float32)

    return {
        # tyc_3DGCN_Block
        "w_ss": w(ks[0], (F, F)), "w_vs": w(ks[1], (F, F)),
        "b_s": jnp.zeros((1, F), jnp.float32),
        "w_vv": w(ks[2], (F, F)), "w_sv": w(ks[3], (F, F)),
        "b_v": jnp.zeros((1, F), jnp.float32),
        # edge_weighting_s / edge_weighting_v  (Linear(F, 1) + Sigmoid)
        "w_es": w(ks[4], (F, 1)), "b_es": jnp.zeros((1, 1), jnp.float32),
        "w_ev": w(ks[5], (F, 1)), "b_ev": jnp.zeros((1, 1), jnp.float32),
        # twolayer_linear_s / twolayer_linear_v
        "w1s": w(ks[6], (F, H)), "b1s": jnp.zeros((1, H), jnp.float32),
        "w1v": w(ks[7], (3 * F, H)), "b1v": jnp.zeros((1, H), jnp.float32),
        # onelayer_linear
        "w2": w(ks[8], (2 * H, out_size)), "b2": jnp.zeros((1, out_size), jnp.float32),
    }


if __name__ == "__main__":
    # small, module-consistent shapes
    N = 16                    # total nodes in the batched graph
    E = 32                    # total edges
    F = 30                    # number_atom_features
    H = 16                    # predictor_hidden_feats
    B = 2                     # number of graphs in the batch
    N_TASKS = 3               # regression mode -> out_size = n_tasks
    OUT = N_TASKS

    root = jax.random.PRNGKey(0)
    kx, kv, kp, ks, kd, kw = jax.random.split(root, 6)

    x = jax.random.normal(kx, (N, F), dtype=jnp.float32)          # g.ndata['x']
    v = jax.random.normal(kv, (N, 3, F), dtype=jnp.float32)       # g.ndata['v']
    pos = jax.random.normal(kp, (N, 3), dtype=jnp.float32)        # g.ndata['pos']
    src = jax.random.randint(ks, (E,), 0, N, dtype=jnp.int32)
    dst = jax.random.randint(kd, (E,), 0, N, dtype=jnp.int32)
    edge_graph_id = jnp.concatenate(
        [jnp.zeros((E // 2,), jnp.int32), jnp.ones((E - E // 2,), jnp.int32)])

    params = init_params(kw, F, H, OUT)

    out = tyc_3dgcn_core_forward(params, x, v, pos, src, dst, edge_graph_id, B)
    out = jax.block_until_ready(out)

    ref = reference_forward(params, x, v, pos, src, dst, edge_graph_id, B)
    np.testing.assert_allclose(np.asarray(out), np.asarray(ref), rtol=1e-4, atol=1e-4)

    print("KERNEL_OK")
</pallas_src>

<mosaic_0001>
module attributes {stable_mosaic.version = 11 : i64} {
  func.func @tyc_3dgcn_kernel(%arg0: memref<32x32xf32, #tpu.memory_space<vmem>>, %arg1: memref<32x32xf32, #tpu.memory_space<vmem>>, %arg2: memref<96x32xf32, #tpu.memory_space<vmem>>, %arg3: memref<96x1xf32, #tpu.memory_space<vmem>>, %arg4: memref<1x32xi32, #tpu.memory_space<vmem>>, %arg5: memref<64x32xf32, #tpu.memory_space<vmem>>, %arg6: memref<1x32xf32, #tpu.memory_space<vmem>>, %arg7: memref<32x32xf32, #tpu.memory_space<vmem>>, %arg8: memref<32x32xf32, #tpu.memory_space<vmem>>, %arg9: memref<1x32xf32, #tpu.memory_space<vmem>>, %arg10: memref<1x32xf32, #tpu.memory_space<vmem>>, %arg11: memref<1x1xf32, #tpu.memory_space<vmem>>, %arg12: memref<1x32xf32, #tpu.memory_space<vmem>>, %arg13: memref<1x1xf32, #tpu.memory_space<vmem>>, %arg14: memref<128x32xf32, #tpu.memory_space<vmem>>, %arg15: memref<1x32xf32, #tpu.memory_space<vmem>>, %arg16: memref<32x128xf32, #tpu.memory_space<vmem>>, %arg17: memref<1x128xf32, #tpu.memory_space<vmem>>, %arg18: memref<8x128xf32, #tpu.memory_space<vmem>>) attributes {dimension_semantics = [], scalar_prefetch = 0 : i64, scratch_operands = 0 : i64, tpu.core_type = #tpu.core_type<tc>} {
    %c0 = arith.constant 0 : index
    %c0_0 = arith.constant 0 : index
    %0 = vector.load %arg0[%c0, %c0_0] : memref<32x32xf32, #tpu.memory_space<vmem>>, vector<32x32xf32>
    %c0_1 = arith.constant 0 : index
    %c0_2 = arith.constant 0 : index
    %1 = vector.load %arg1[%c0_1, %c0_2] : memref<32x32xf32, #tpu.memory_space<vmem>>, vector<32x32xf32>
    %c0_3 = arith.constant 0 : index
    %c0_4 = arith.constant 0 : index
    %2 = vector.load %arg2[%c0_3, %c0_4] : memref<96x32xf32, #tpu.memory_space<vmem>>, vector<96x32xf32>
    %c0_5 = arith.constant 0 : index
    %c0_6 = arith.constant 0 : index
    %3 = vector.load %arg3[%c0_5, %c0_6] : memref<96x1xf32, #tpu.memory_space<vmem>>, vector<96x1xf32>
    %4 = vector.broadcast %3 : vector<96x1xf32> to vector<96x32xf32>
    %5 = arith.mulf %2, %4 : vector<96x32xf32>
    %6 = vector.extract_strided_slice %5 {offsets = [0, 0], sizes = [32, 32], strides = [1, 1]} : vector<96x32xf32> to vector<32x32xf32>
    %7 = vector.extract_strided_slice %5 {offsets = [32, 0], sizes = [32, 32], strides = [1, 1]} : vector<96x32xf32> to vector<32x32xf32>
    %8 = arith.addf %6, %7 : vector<32x32xf32>
    %9 = vector.extract_strided_slice %5 {offsets = [64, 0], sizes = [32, 32], strides = [1, 1]} : vector<96x32xf32> to vector<32x32xf32>
    %10 = arith.addf %8, %9 : vector<32x32xf32>
    %11 = tpu.concatenate %0, %10 in 1 : vector<32x32xf32>, vector<32x32xf32> -> vector<32x64xf32>
    %c0_7 = arith.constant 0 : index
    %c0_8 = arith.constant 0 : index
    %12 = vector.load %arg5[%c0_7, %c0_8] : memref<64x32xf32, #tpu.memory_space<vmem>>, vector<64x32xf32>
    %cst = arith.constant dense<0.000000e+00> : vector<32x32xf32>
    %13 = tpu.matmul %11, %12, %cst {dimension_numbers = #tpu.dot_dimension_numbers<[1], [0], [0], [1], [0, 0, 1, 1], [], []>} : vector<32x64xf32>, vector<64x32xf32>, vector<32x32xf32> -> vector<32x32xf32>
    %c0_9 = arith.constant 0 : index
    %c0_10 = arith.constant 0 : index
    %14 = vector.load %arg6[%c0_9, %c0_10] : memref<1x32xf32, #tpu.memory_space<vmem>>, vector<1x32xf32>
    %15 = vector.broadcast %14 : vector<1x32xf32> to vector<32x32xf32>
    %16 = arith.addf %13, %15 : vector<32x32xf32>
    %cst_11 = arith.constant 0.000000e+00 : f32
    %17 = vector.broadcast %cst_11 : f32 to vector<32x32xf32>
    %18 = arith.maximumf %16, %17 : vector<32x32xf32>
    %c0_12 = arith.constant 0 : index
    %c0_13 = arith.constant 0 : index
    %19 = vector.load %arg7[%c0_12, %c0_13] : memref<32x32xf32, #tpu.memory_space<vmem>>, vector<32x32xf32>
    %cst_14 = arith.constant dense<0.000000e+00> : vector<32x32xf32>
    %20 = tpu.matmul %1, %19, %cst_14 {dimension_numbers = #tpu.dot_dimension_numbers<[1], [0], [0], [1], [0, 0, 1, 1], [], []>} : vector<32x32xf32>, vector<32x32xf32>, vector<32x32xf32> -> vector<32x32xf32>
    %21 = tpu.concatenate %20, %20, %20 in 0 : vector<32x32xf32>, vector<32x32xf32>, vector<32x32xf32> -> vector<96x32xf32>
    %c0_15 = arith.constant 0 : index
    %c0_16 = arith.constant 0 : index
    %22 = vector.load %arg8[%c0_15, %c0_16] : memref<32x32xf32, #tpu.memory_space<vmem>>, vector<32x32xf32>
    %cst_17 = arith.constant dense<0.000000e+00> : vector<96x32xf32>
    %23 = tpu.matmul %2, %22, %cst_17 {dimension_numbers = #tpu.dot_dimension_numbers<[1], [0], [0], [1], [0, 0, 1, 1], [], []>} : vector<96x32xf32>, vector<32x32xf32>, vector<96x32xf32> -> vector<96x32xf32>
    %24 = vector.broadcast %3 : vector<96x1xf32> to vector<96x32xf32>
    %25 = arith.mulf %24, %21 : vector<96x32xf32>
    %26 = arith.addf %23, %25 : vector<96x32xf32>
    %c0_18 = arith.constant 0 : index
    %c0_19 = arith.constant 0 : index
    %27 = vector.load %arg9[%c0_18, %c0_19] : memref<1x32xf32, #tpu.memory_space<vmem>>, vector<1x32xf32>
    %28 = vector.broadcast %27 : vector<1x32xf32> to vector<96x32xf32>
    %29 = arith.addf %26, %28 : vector<96x32xf32>
    %cst_20 = arith.constant 0.000000e+00 : f32
    %30 = vector.broadcast %cst_20 : f32 to vector<96x32xf32>
    %31 = arith.maximumf %29, %30 : vector<96x32xf32>
    %c0_21 = arith.constant 0 : index
    %c0_22 = arith.constant 0 : index
    %32 = vector.load %arg10[%c0_21, %c0_22] : memref<1x32xf32, #tpu.memory_space<vmem>>, vector<1x32xf32>
    %33 = vector.broadcast %32 : vector<1x32xf32> to vector<32x32xf32>
    %34 = arith.mulf %18, %33 : vector<32x32xf32>
    %cst_23 = arith.constant dense<0.000000e+00> : vector<32xf32>
    %35 = vector.multi_reduction <add>, %34, %cst_23 [1] : vector<32x32xf32> to vector<32xf32>
    %36 = vector.shape_cast %35 : vector<32xf32> to vector<32x1xf32>
    %c0_24 = arith.constant 0 : index
    %c0_25 = arith.constant 0 : index
    %37 = vector.load %arg11[%c0_24, %c0_25] : memref<1x1xf32, #tpu.memory_space<vmem>>, vector<1x1xf32>
    %38 = vector.broadcast %37 : vector<1x1xf32> to vector<32x1xf32>
    %39 = arith.addf %36, %38 : vector<32x1xf32>
    %cst_26 = arith.constant 5.000000e-01 : f32
    %40 = vector.broadcast %cst_26 : f32 to vector<32x1xf32>
    %41 = arith.mulf %40, %39 : vector<32x1xf32>
    %42 = math.tanh %41 : vector<32x1xf32>
    %cst_27 = arith.constant 1.000000e+00 : f32
    %43 = vector.broadcast %cst_27 : f32 to vector<32x1xf32>
    %44 = arith.addf %42, %43 : vector<32x1xf32>
    %cst_28 = arith.constant 5.000000e-01 : f32
    %45 = vector.broadcast %cst_28 : f32 to vector<32x1xf32>
    %46 = arith.mulf %45, %44 : vector<32x1xf32>
    %c0_29 = arith.constant 0 : index
    %c0_30 = arith.constant 0 : index
    %47 = vector.load %arg12[%c0_29, %c0_30] : memref<1x32xf32, #tpu.memory_space<vmem>>, vector<1x32xf32>
    %48 = vector.broadcast %47 : vector<1x32xf32> to vector<96x32xf32>
    %49 = arith.mulf %31, %48 : vector<96x32xf32>
    %cst_31 = arith.constant dense<0.000000e+00> : vector<96xf32>
    %50 = vector.multi_reduction <add>, %49, %cst_31 [1] : vector<96x32xf32> to vector<96xf32>
    %51 = vector.shape_cast %50 : vector<96xf32> to vector<96x1xf32>
    %c0_32 = arith.constant 0 : index
    %c0_33 = arith.constant 0 : index
    %52 = vector.load %arg13[%c0_32, %c0_33] : memref<1x1xf32, #tpu.memory_space<vmem>>, vector<1x1xf32>
    %53 = vector.broadcast %52 : vector<1x1xf32> to vector<96x1xf32>
    %54 = arith.addf %51, %53 : vector<96x1xf32>
    %cst_34 = arith.constant 5.000000e-01 : f32
    %55 = vector.broadcast %cst_34 : f32 to vector<96x1xf32>
    %56 = arith.mulf %55, %54 : vector<96x1xf32>
    %57 = math.tanh %56 : vector<96x1xf32>
    %cst_35 = arith.constant 1.000000e+00 : f32
    %58 = vector.broadcast %cst_35 : f32 to vector<96x1xf32>
    %59 = arith.addf %57, %58 : vector<96x1xf32>
    %cst_36 = arith.constant 5.000000e-01 : f32
    %60 = vector.broadcast %cst_36 : f32 to vector<96x1xf32>
    %61 = arith.mulf %60, %59 : vector<96x1xf32>
    %62 = vector.broadcast %46 : vector<32x1xf32> to vector<32x32xf32>
    %63 = arith.mulf %62, %18 : vector<32x32xf32>
    %64 = vector.broadcast %61 : vector<96x1xf32> to vector<96x32xf32>
    %65 = arith.mulf %64, %31 : vector<96x32xf32>
    %66 = vector.extract_strided_slice %65 {offsets = [0, 0], sizes = [32, 32], strides = [1, 1]} : vector<96x32xf32> to vector<32x32xf32>
    %67 = vector.extract_strided_slice %65 {offsets = [32, 0], sizes = [32, 32], strides = [1, 1]} : vector<96x32xf32> to vector<32x32xf32>
    %68 = vector.extract_strided_slice %65 {offsets = [64, 0], sizes = [32, 32], strides = [1, 1]} : vector<96x32xf32> to vector<32x32xf32>
    %69 = tpu.concatenate %63, %66, %67, %68 in 1 : vector<32x32xf32>, vector<32x32xf32>, vector<32x32xf32>, vector<32x32xf32> -> vector<32x128xf32>
    %c0_37 = arith.constant 0 : index
    %c0_38 = arith.constant 0 : index
    %70 = vector.load %arg4[%c0_37, %c0_38] : memref<1x32xi32, #tpu.memory_space<vmem>>, vector<1x32xi32>
    %71 = tpu.iota {dimensions = array<i32: 0>} : vector<8x32xi32>
    %72 = vector.broadcast %70 : vector<1x32xi32> to vector<8x32xi32>
    %73 = arith.cmpi eq, %71, %72 : vector<8x32xi32>
    %74 = arith.extui %73 : vector<8x32xi1> to vector<8x32xi32>
    %75 = arith.sitofp %74 : vector<8x32xi32> to vector<8x32xf32>
    %cst_39 = arith.constant dense<0.000000e+00> : vector<8x128xf32>
    %76 = tpu.matmul %75, %69, %cst_39 {dimension_numbers = #tpu.dot_dimension_numbers<[1], [0], [0], [1], [0, 0, 1, 1], [], []>} : vector<8x32xf32>, vector<32x128xf32>, vector<8x128xf32> -> vector<8x128xf32>
    %c0_40 = arith.constant 0 : index
    %c0_41 = arith.constant 0 : index
    %77 = vector.load %arg14[%c0_40, %c0_41] : memref<128x32xf32, #tpu.memory_space<vmem>>, vector<128x32xf32>
    %cst_42 = arith.constant dense<0.000000e+00> : vector<8x32xf32>
    %78 = tpu.matmul %76, %77, %cst_42 {dimension_numbers = #tpu.dot_dimension_numbers<[1], [0], [0], [1], [0, 0, 1, 1], [], []>} : vector<8x128xf32>, vector<128x32xf32>, vector<8x32xf32> -> vector<8x32xf32>
    %c0_43 = arith.constant 0 : index
    %c0_44 = arith.constant 0 : index
    %79 = vector.load %arg15[%c0_43, %c0_44] : memref<1x32xf32, #tpu.memory_space<vmem>>, vector<1x32xf32>
    %80 = vector.broadcast %79 : vector<1x32xf32> to vector<8x32xf32>
    %81 = arith.addf %78, %80 : vector<8x32xf32>
    %cst_45 = arith.constant 0.000000e+00 : f32
    %82 = vector.broadcast %cst_45 : f32 to vector<8x32xf32>
    %83 = arith.maximumf %81, %82 : vector<8x32xf32>
    %c0_46 = arith.constant 0 : index
    %c0_47 = arith.constant 0 : index
    %84 = vector.load %arg16[%c0_46, %c0_47] : memref<32x128xf32, #tpu.memory_space<vmem>>, vector<32x128xf32>
    %cst_48 = arith.constant dense<0.000000e+00> : vector<8x128xf32>
    %85 = tpu.matmul %83, %84, %cst_48 {dimension_numbers = #tpu.dot_dimension_numbers<[1], [0], [0], [1], [0, 0, 1, 1], [], []>} : vector<8x32xf32>, vector<32x128xf32>, vector<8x128xf32> -> vector<8x128xf32>
    %c0_49 = arith.constant 0 : index
    %c0_50 = arith.constant 0 : index
    %86 = vector.load %arg17[%c0_49, %c0_50] : memref<1x128xf32, #tpu.memory_space<vmem>>, vector<1x128xf32>
    %87 = vector.broadcast %86 : vector<1x128xf32> to vector<8x128xf32>
    %88 = arith.addf %85, %87 : vector<8x128xf32>
    %c0_51 = arith.constant 0 : index
    %c0_52 = arith.constant 0 : index
    %89 = vector.load %arg18[%c0_51, %c0_52] : memref<8x128xf32, #tpu.memory_space<vmem>>, vector<8x128xf32>
    tpu.vector_store %arg18[%c0_51, %c0_52], %88 {strides = array<i32>} : memref<8x128xf32, #tpu.memory_space<vmem>>, vector<8x128xf32>,
    return
  }
}

</mosaic_0001>

<llo_original>
// kernel: tpu_custom_call.1
$region0: #{tpu_custom_call.1}
  #allocation0 [shape = 'u32[]', space=smem, size = 0x4, offset = 0x4, fixed_abs, tag = 'smem constant byte address 0x4 - core index']
  #allocation1 [shape = 'u32[72,128]{1,0:T(1,128)}', space=vmem, size = 0x9000, scoped, tag = 'internal scratch']
  #allocation2 [shape = 'f32[1,1]{1,0:T(1,128)S(1)}', space=vmem, size = 0x200, scoped, tag = 'scoped memory for tpu_custom_call.1']
  #allocation3 [shape = 'f32[1,1]{1,0:T(1,128)S(1)}', space=vmem, size = 0x200, scoped, tag = 'scoped memory for tpu_custom_call.1']
  %s0 = inlined_call_operand.vmem [shape: f32[32,32], index: 0, kind: input, shape index: {}]
  %s1 = inlined_call_operand.vmem [shape: f32[32,32], index: 1, kind: input, shape index: {}]
  %s2 = inlined_call_operand.vmem [shape: f32[96,32], index: 2, kind: input, shape index: {}]
  %s3 = inlined_call_operand.vmem [shape: f32[96,1], index: 3, kind: input, shape index: {}]
  %s4 = inlined_call_operand.vmem [shape: s32[1,32], index: 4, kind: input, shape index: {}]
  %s5 = inlined_call_operand.vmem [shape: f32[64,32], index: 5, kind: input, shape index: {}]
  %s6 = inlined_call_operand.vmem [shape: f32[1,32], index: 6, kind: input, shape index: {}]
  %s7 = inlined_call_operand.vmem [shape: f32[32,32], index: 7, kind: input, shape index: {}]
  %s8 = inlined_call_operand.vmem [shape: f32[32,32], index: 8, kind: input, shape index: {}]
  %s9 = inlined_call_operand.vmem [shape: f32[1,32], index: 9, kind: input, shape index: {}]
  %s10 = inlined_call_operand.vmem [shape: f32[1,32], index: 10, kind: input, shape index: {}]
  %s11 = inlined_call_operand.<no memory space> [shape: f32[1,1], index: 11, kind: input, shape index: {}]
  %s12 = inlined_call_operand.vmem [shape: f32[1,32], index: 12, kind: input, shape index: {}]
  %s13 = inlined_call_operand.<no memory space> [shape: f32[1,1], index: 13, kind: input, shape index: {}]
  %s14 = inlined_call_operand.vmem [shape: f32[128,32], index: 14, kind: input, shape index: {}]
  %s15 = inlined_call_operand.vmem [shape: f32[1,32], index: 15, kind: input, shape index: {}]
  %s16 = inlined_call_operand.vmem [shape: f32[32,128], index: 16, kind: input, shape index: {}]
  %s17 = inlined_call_operand.vmem [shape: f32[1,128], index: 17, kind: input, shape index: {}]
  %s18 = inlined_call_operand.hbm [shape: f32[8,128], index: 18, kind: output, shape index: {}]
  %s19 = sld [smem:[#allocation0]]
  $region82: #{tpu_custom_call.1} parent=0
    _
  %s21 = ssub.s32 1, %s19
  %s22 = scalar_select 0, %s21, %s19
  %v23 = vstv %s11
  %24 = vst [vmem:[#allocation2] sm:$0x1] %v23
  %v25 = vstv %s13
  %26 = vst [vmem:[#allocation3] sm:$0x1] %v25
  $region1: #{tpu_custom_call.1} parent=0
    #allocation4 [shape = 'u8[4096]{0}', space=vmem, size = 0x1000, scoped, tag = 'output window, operand 0, single buffered']
    #allocation5 [shape = 's32[1]{0}', space=sflag, size = 0x4, scoped, tag = 'scoped memory for tpu_custom_call.1']
    %27 = vsyncpa [#allocation5], 0
    // Predicated region
    $region2: #{tpu_custom_call.1} parent=1 // pred_check
      _
    $region3: #{tpu_custom_call.1} parent=1 // pred_check_branch
      %29 = sbr.rel (0) target = $region5
    $region4: #{tpu_custom_call.1} parent=1 // pred_region
      _
    $region5: #{tpu_custom_call.1} parent=1 // pred_fallthru
      _
    // Predicated region
    $region6: #{tpu_custom_call.1} parent=1 // pred_check
      _
    $region7: #{tpu_custom_call.1} parent=1 // pred_check_branch
      %31 = sbr.rel (0) target = $region9
    $region8: #{tpu_custom_call.1} parent=1 // pred_region
      _
    $region9: #{tpu_custom_call.1} parent=1 // pred_fallthru
      _
    // Predicated region
    $region10: #{tpu_custom_call.1} parent=1 // pred_check
      _
    $region11: #{tpu_custom_call.1} parent=1 // pred_check_branch
      %33 = sbr.rel (0) target = $region13
    $region12: #{tpu_custom_call.1} parent=1 // pred_region
      _
    $region13: #{tpu_custom_call.1} parent=1 // pred_fallthru
      _
    // Predicated region
    $region14: #{tpu_custom_call.1} parent=1 // pred_check
      _
    $region15: #{tpu_custom_call.1} parent=1 // pred_check_branch
      %35 = sbr.rel (0) target = $region17
    $region16: #{tpu_custom_call.1} parent=1 // pred_region
      _
    $region17: #{tpu_custom_call.1} parent=1 // pred_fallthru
      _
    // Predicated region
    $region18: #{tpu_custom_call.1} parent=1 // pred_check
      _
    $region19: #{tpu_custom_call.1} parent=1 // pred_check_branch
      %37 = sbr.rel (0) target = $region21
    $region20: #{tpu_custom_call.1} parent=1 // pred_region
      _
    $region21: #{tpu_custom_call.1} parent=1 // pred_fallthru
      _
    // Predicated region
    $region22: #{tpu_custom_call.1} parent=1 // pred_check
      _
    $region23: #{tpu_custom_call.1} parent=1 // pred_check_branch
      %39 = sbr.rel (0) target = $region25
    $region24: #{tpu_custom_call.1} parent=1 // pred_region
      _
    $region25: #{tpu_custom_call.1} parent=1 // pred_fallthru
      _
    // Predicated region
    $region26: #{tpu_custom_call.1} parent=1 // pred_check
      _
    $region27: #{tpu_custom_call.1} parent=1 // pred_check_branch
      %41 = sbr.rel (0) target = $region29
    $region28: #{tpu_custom_call.1} parent=1 // pred_region
      _
    $region29: #{tpu_custom_call.1} parent=1 // pred_fallthru
      _
    // Predicated region
    $region30: #{tpu_custom_call.1} parent=1 // pred_check
      _
    $region31: #{tpu_custom_call.1} parent=1 // pred_check_branch
      %43 = sbr.rel (0) target = $region33
    $region32: #{tpu_custom_call.1} parent=1 // pred_region
      _
    $region33: #{tpu_custom_call.1} parent=1 // pred_fallthru
      _
    // Predicated region
    $region34: #{tpu_custom_call.1} parent=1 // pred_check
      _
    $region35: #{tpu_custom_call.1} parent=1 // pred_check_branch
      %45 = sbr.rel (0) target = $region37
    $region36: #{tpu_custom_call.1} parent=1 // pred_region
      _
    $region37: #{tpu_custom_call.1} parent=1 // pred_fallthru
      _
    // Predicated region
    $region38: #{tpu_custom_call.1} parent=1 // pred_check
      _
    $region39: #{tpu_custom_call.1} parent=1 // pred_check_branch
      %47 = sbr.rel (0) target = $region41
    $region40: #{tpu_custom_call.1} parent=1 // pred_region
      _
    $region41: #{tpu_custom_call.1} parent=1 // pred_fallthru
      _
    // Predicated region
    $region42: #{tpu_custom_call.1} parent=1 // pred_check
      _
    $region43: #{tpu_custom_call.1} parent=1 // pred_check_branch
      %49 = sbr.rel (0) target = $region45
    $region44: #{tpu_custom_call.1} parent=1 // pred_region
      _
    $region45: #{tpu_custom_call.1} parent=1 // pred_fallthru
      _
    // Predicated region
    $region46: #{tpu_custom_call.1} parent=1 // pred_check
      _
    $region47: #{tpu_custom_call.1} parent=1 // pred_check_branch
      %51 = sbr.rel (0) target = $region49
    $region48: #{tpu_custom_call.1} parent=1 // pred_region
      _
    $region49: #{tpu_custom_call.1} parent=1 // pred_fallthru
      _
    // Predicated region
    $region50: #{tpu_custom_call.1} parent=1 // pred_check
      _
    $region51: #{tpu_custom_call.1} parent=1 // pred_check_branch
      %53 = sbr.rel (0) target = $region53
    $region52: #{tpu_custom_call.1} parent=1 // pred_region
      _
    $region53: #{tpu_custom_call.1} parent=1 // pred_fallthru
      _
    // Predicated region
    $region54: #{tpu_custom_call.1} parent=1 // pred_check
      _
    $region55: #{tpu_custom_call.1} parent=1 // pred_check_branch
      %55 = sbr.rel (0) target = $region57
    $region56: #{tpu_custom_call.1} parent=1 // pred_region
      _
    $region57: #{tpu_custom_call.1} parent=1 // pred_fallthru
      _
    // Predicated region
    $region58: #{tpu_custom_call.1} parent=1 // pred_check
      _
    $region59: #{tpu_custom_call.1} parent=1 // pred_check_branch
      %57 = sbr.rel (0) target = $region61
    $region60: #{tpu_custom_call.1} parent=1 // pred_region
      _
    $region61: #{tpu_custom_call.1} parent=1 // pred_fallthru
      _
    // Predicated region
    $region62: #{tpu_custom_call.1} parent=1 // pred_check
      _
    $region63: #{tpu_custom_call.1} parent=1 // pred_check_branch
      %59 = sbr.rel (0) target = $region65
    $region64: #{tpu_custom_call.1} parent=1 // pred_region
      _
    $region65: #{tpu_custom_call.1} parent=1 // pred_fallthru
      _
    // Predicated region
    $region66: #{tpu_custom_call.1} parent=1 // pred_check
      _
    $region67: #{tpu_custom_call.1} parent=1 // pred_check_branch
      %61 = sbr.rel (0) target = $region69
    $region68: #{tpu_custom_call.1} parent=1 // pred_region
      _
    $region69: #{tpu_custom_call.1} parent=1 // pred_fallthru
      _
    // Predicated region
    $region70: #{tpu_custom_call.1} parent=1 // pred_check
      _
    $region71: #{tpu_custom_call.1} parent=1 // pred_check_branch
      %63 = sbr.rel (0) target = $region73
    $region72: #{tpu_custom_call.1} parent=1 // pred_region
      _
    $region73: #{tpu_custom_call.1} parent=1 // pred_fallthru
      _
    %v64 = vld [vmem:[%s0] sm:$0xff]
    %v65 = vld [vmem:[%s0 + $0x8] sm:$0xff]
    %v66 = vld [vmem:[%s0 + $0x10] sm:$0xff]
    %v67 = vld [vmem:[%s0 + $0x18] sm:$0xff]
    %v68 = vld [vmem:[%s1] sm:$0xff]
    %v69 = vld [vmem:[%s1 + $0x8] sm:$0xff]
    %v70 = vld [vmem:[%s1 + $0x10] sm:$0xff]
    %v71 = vld [vmem:[%s1 + $0x18] sm:$0xff]
    %v72 = vld [vmem:[%s2] sm:$0xff]
    %v73 = vld [vmem:[%s2 + $0x8] sm:$0xff]
    %v74 = vld [vmem:[%s2 + $0x10] sm:$0xff]
    %v75 = vld [vmem:[%s2 + $0x18] sm:$0xff]
    %v76 = vld [vmem:[%s2 + $0x20] sm:$0xff]
    %v77 = vld [vmem:[%s2 + $0x28] sm:$0xff]
    %v78 = vld [vmem:[%s2 + $0x30] sm:$0xff]
    %v79 = vld [vmem:[%s2 + $0x38] sm:$0xff]
    %v80 = vld [vmem:[%s2 + $0x40] sm:$0xff]
    %v81 = vld [vmem:[%s2 + $0x48] sm:$0xff]
    %v82 = vld [vmem:[%s2 + $0x50] sm:$0xff]
    %v83 = vld [vmem:[%s2 + $0x58] sm:$0xff]
    %v84 = vld [vmem:[%s3] sm:$0xff]
    %v85 = vld [vmem:[%s3 + $0x8] sm:$0xff]
    %v86 = vld [vmem:[%s3 + $0x10] sm:$0xff]
    %v87 = vld [vmem:[%s3 + $0x18] sm:$0xff]
    %v88 = vld [vmem:[%s3 + $0x20] sm:$0xff]
    %v89 = vld [vmem:[%s3 + $0x28] sm:$0xff]
    %v90 = vld [vmem:[%s3 + $0x30] sm:$0xff]
    %v91 = vld [vmem:[%s3 + $0x38] sm:$0xff]
    %v92 = vld [vmem:[%s3 + $0x40] sm:$0xff]
    %v93 = vld [vmem:[%s3 + $0x48] sm:$0xff]
    %v94 = vld [vmem:[%s3 + $0x50] sm:$0xff]
    %v95 = vld [vmem:[%s3 + $0x58] sm:$0xff]
    %97 = vset.pattern.permute.xlu0 0
    %98 = vperm.xlu0 %97, %v84
    %v99 = vpop.permute.xlu0 %98
    %102 = vset.pattern.permute.xlu0 0
    %103 = vperm.xlu0 %102, %v85
    %v104 = vpop.permute.xlu0 %103
    %107 = vset.pattern.permute.xlu0 0
    %108 = vperm.xlu0 %107, %v86
    %v109 = vpop.permute.xlu0 %108
    %112 = vset.pattern.permute.xlu0 0
    %113 = vperm.xlu0 %112, %v87
    %v114 = vpop.permute.xlu0 %113
    %117 = vset.pattern.permute.xlu0 0
    %118 = vperm.xlu0 %117, %v88
    %v119 = vpop.permute.xlu0 %118
    %122 = vset.pattern.permute.xlu0 0
    %123 = vperm.xlu0 %122, %v89
    %v124 = vpop.permute.xlu0 %123
    %127 = vset.pattern.permute.xlu0 0
    %128 = vperm.xlu0 %127, %v90
    %v129 = vpop.permute.xlu0 %128
    %132 = vset.pattern.permute.xlu0 0
    %133 = vperm.xlu0 %132, %v91
    %v134 = vpop.permute.xlu0 %133
    %137 = vset.pattern.permute.xlu0 0
    %138 = vperm.xlu0 %137, %v92
    %v139 = vpop.permute.xlu0 %138
    %142 = vset.pattern.permute.xlu0 0
    %143 = vperm.xlu0 %142, %v93
    %v144 = vpop.permute.xlu0 %143
    %147 = vset.pattern.permute.xlu0 0
    %148 = vperm.xlu0 %147, %v94
    %v149 = vpop.permute.xlu0 %148
    %152 = vset.pattern.permute.xlu0 0
    %153 = vperm.xlu0 %152, %v95
    %v154 = vpop.permute.xlu0 %153
    %v156 = vmul.f32 %v72, %v99
    %v157 = vmul.f32 %v73, %v104
    %v158 = vmul.f32 %v74, %v109
    %v159 = vmul.f32 %v75, %v114
    %v160 = vmul.f32 %v76, %v119
    %v161 = vmul.f32 %v77, %v124
    %v162 = vmul.f32 %v78, %v129
    %v163 = vmul.f32 %v79, %v134
    %v164 = vmul.f32 %v80, %v139
    %v165 = vmul.f32 %v81, %v144
    %v166 = vmul.f32 %v82, %v149
    %v167 = vmul.f32 %v83, %v154
    %v168 = vadd.f32 %v156, %v160
    %v169 = vadd.f32 %v157, %v161
    %v170 = vadd.f32 %v158, %v162
    %v171 = vadd.f32 %v159, %v163
    %v172 = vadd.f32 %v168, %v164
    %v173 = vadd.f32 %v169, %v165
    %v174 = vadd.f32 %v170, %v166
    %v175 = vadd.f32 %v171, %v167
    %180 = vrot.lane.b32.xlu0 %v172, 32
    %v181 = vpop.permute.xlu0 %180
    %182 = vrot.lane.b32.xlu0 %v173, 32
    %v183 = vpop.permute.xlu0 %182
    %184 = vrot.lane.b32.xlu0 %v174, 32
    %v185 = vpop.permute.xlu0 %184
    %186 = vrot.lane.b32.xlu0 %v175, 32
    %v187 = vpop.permute.xlu0 %186
    %vm192 = vcmask 261120
    %v193 = vsel %vm192, %v64, %v181
    %v194 = vsel %vm192, %v65, %v183
    %v195 = vsel %vm192, %v66, %v185
    %v196 = vsel %vm192, %v67, %v187
    %v197 = vld [vmem:[%s5] sm:$0xff]
    %v198 = vld [vmem:[%s5 + $0x8] sm:$0xff]
    %v199 = vld [vmem:[%s5 + $0x10] sm:$0xff]
    %v200 = vld [vmem:[%s5 + $0x18] sm:$0xff]
    %v201 = vld [vmem:[%s5 + $0x20] sm:$0xff]
    %v202 = vld [vmem:[%s5 + $0x28] sm:$0xff]
    %v203 = vld [vmem:[%s5 + $0x30] sm:$0xff]
    %v204 = vld [vmem:[%s5 + $0x38] sm:$0xff]
    %v205 = vld [vmem:[%s6] sm:$0x1]
    %v207 = vperm.slane %v205, 0
    %vm209 = vcmask 523264
    %v211 = vsel %vm209, %v193, 0
    %v214 = vsel %vm209, %v194, 0
    %v217 = vsel %vm209, %v195, 0
    %v220 = vsel %vm209, %v196, 0
    %222 = vmatpush.msra.mxu0 0.0
    %223 = vmatpush.msra.mxu0 0.0
    %224 = vmatpush.msra.mxu0 0.0
    %225 = vmatpush.msra.mxu0 0.0
    %226 = vmatpush.msra.mxu0 0.0
    %227 = vmatpush.msra.mxu0 0.0
    %228 = vmatpush.msra.mxu0 0.0
    %229 = vmatpush.msra.mxu0 0.0
    %230 = vmatpush.msra.mxu0 %v204
    %231 = vmatpush.msra.mxu0 %v203
    %232 = vmatpush.msra.mxu0 %v202
    %233 = vmatpush.msra.mxu0 %v201
    %234 = vmatpush.msra.mxu0 %v200
    %235 = vmatpush.msra.mxu0 %v199
    %236 = vmatpush.msra.mxu0 %v198
    %237 = vmatpush.msra.mxu0 %v197
    %238 = vmatmul.f32.gmra.mxu0 %v211
    %v239 = vpop.f32.mrf.mxu0
    %v240 = vadd.f32 %v207, %v239
    %241 = vmatmul.f32.gmra.mxu0 %v214
    %v242 = vpop.f32.mrf.mxu0
    %v243 = vadd.f32 %v207, %v242
    %244 = vmatmul.f32.gmra.mxu0 %v217
    %v245 = vpop.f32.mrf.mxu0
    %v246 = vadd.f32 %v207, %v245
    %247 = vmatmul.f32.gmra.mxu0 %v220
    %v248 = vpop.f32.mrf.mxu0
    %v249 = vadd.f32 %v207, %v248
    %250 = vdwg.mxu0
    %v251 = vmax.f32 %v240, 0.0
    %v252 = vmax.f32 %v243, 0.0
    %v253 = vmax.f32 %v246, 0.0
    %v254 = vmax.f32 %v249, 0.0
    %v255 = vld [vmem:[%s7] sm:$0xff]
    %v256 = vld [vmem:[%s7 + $0x8] sm:$0xff]
    %v257 = vld [vmem:[%s7 + $0x10] sm:$0xff]
    %v258 = vld [vmem:[%s7 + $0x18] sm:$0xff]
    %v260 = vsel %vm192, %v68, 0
    %v263 = vsel %vm192, %v69, 0
    %v266 = vsel %vm192, %v70, 0
    %v269 = vsel %vm192, %v71, 0
    %271 = vmatpush.msra.mxu0 0.0
    %272 = vmatpush.msra.mxu0 0.0
    %273 = vmatpush.msra.mxu0 0.0
    %274 = vmatpush.msra.mxu0 0.0
    %275 = vmatpush.msra.mxu0 0.0
    %276 = vmatpush.msra.mxu0 0.0
    %277 = vmatpush.msra.mxu0 0.0
    %278 = vmatpush.msra.mxu0 0.0
    %279 = vmatpush.msra.mxu0 0.0
    %280 = vmatpush.msra.mxu0 0.0
    %281 = vmatpush.msra.mxu0 0.0
    %282 = vmatpush.msra.mxu0 0.0
    %283 = vmatpush.msra.mxu0 %v258
    %284 = vmatpush.msra.mxu0 %v257
    %285 = vmatpush.msra.mxu0 %v256
    %286 = vmatpush.msra.mxu0 %v255
    %287 = vmatmul.f32.gmra.mxu0 %v260
    %v288 = vpop.f32.mrf.mxu0
    %v289 = vadd.f32 0.0, %v288
    %290 = vmatmul.f32.gmra.mxu0 %v263
    %v291 = vpop.f32.mrf.mxu0
    %v292 = vadd.f32 0.0, %v291
    %293 = vmatmul.f32.gmra.mxu0 %v266
    %v294 = vpop.f32.mrf.mxu0
    %v295 = vadd.f32 0.0, %v294
    %296 = vmatmul.f32.gmra.mxu0 %v269
    %v297 = vpop.f32.mrf.mxu0
    %v298 = vadd.f32 0.0, %v297
    %299 = vdwg.mxu0
    %v300 = vld [vmem:[%s8] sm:$0xff]
    %v301 = vld [vmem:[%s8 + $0x8] sm:$0xff]
    %v302 = vld [vmem:[%s8 + $0x10] sm:$0xff]
    %v303 = vld [vmem:[%s8 + $0x18] sm:$0xff]
    %v304 = vmul.f32 %v99, %v289
    %v305 = vmul.f32 %v104, %v292
    %v306 = vmul.f32 %v109, %v295
    %v307 = vmul.f32 %v114, %v298
    %v308 = vmul.f32 %v119, %v289
    %v309 = vmul.f32 %v124, %v292
    %v310 = vmul.f32 %v129, %v295
    %v311 = vmul.f32 %v134, %v298
    %v312 = vmul.f32 %v139, %v289
    %v313 = vmul.f32 %v144, %v292
    %v314 = vmul.f32 %v149, %v295
    %v315 = vmul.f32 %v154, %v298
    %v317 = vsel %vm192, %v72, 0
    %v320 = vsel %vm192, %v73, 0
    %v323 = vsel %vm192, %v74, 0
    %v326 = vsel %vm192, %v75, 0
    %v329 = vsel %vm192, %v76, 0
    %v332 = vsel %vm192, %v77, 0
    %v335 = vsel %vm192, %v78, 0
    %v338 = vsel %vm192, %v79, 0
    %v341 = vsel %vm192, %v80, 0
    %v344 = vsel %vm192, %v81, 0
    %v347 = vsel %vm192, %v82, 0
    %v350 = vsel %vm192, %v83, 0
    %352 = vmatpush.msra.mxu0 0.0
    %353 = vmatpush.msra.mxu0 0.0
    %354 = vmatpush.msra.mxu0 0.0
    %355 = vmatpush.msra.mxu0 0.0
    %356 = vmatpush.msra.mxu0 0.0
    %357 = vmatpush.msra.mxu0 0.0
    %358 = vmatpush.msra.mxu0 0.0
    %359 = vmatpush.msra.mxu0 0.0
    %360 = vmatpush.msra.mxu0 0.0
    %361 = vmatpush.msra.mxu0 0.0
    %362 = vmatpush.msra.mxu0 0.0
    %363 = vmatpush.msra.mxu0 0.0
    %364 = vmatpush.msra.mxu0 %v303
    %365 = vmatpush.msra.mxu0 %v302
    %366 = vmatpush.msra.mxu0 %v301
    %367 = vmatpush.msra.mxu0 %v300
    %368 = vmatmul.f32.gmra.mxu0 %v317
    %v369 = vpop.f32.mrf.mxu0
    %v370 = vadd.f32 %v304, %v369
    %371 = vmatmul.f32.gmra.mxu0 %v320
    %v372 = vpop.f32.mrf.mxu0
    %v373 = vadd.f32 %v305, %v372
    %374 = vmatmul.f32.gmra.mxu0 %v323
    %v375 = vpop.f32.mrf.mxu0
    %v376 = vadd.f32 %v306, %v375
    %377 = vmatmul.f32.gmra.mxu0 %v326
    %v378 = vpop.f32.mrf.mxu0
    %v379 = vadd.f32 %v307, %v378
    %380 = vmatmul.f32.gmra.mxu0 %v329
    %v381 = vpop.f32.mrf.mxu0
    %v382 = vadd.f32 %v308, %v381
    %383 = vmatmul.f32.gmra.mxu0 %v332
    %v384 = vpop.f32.mrf.mxu0
    %v385 = vadd.f32 %v309, %v384
    %386 = vmatmul.f32.gmra.mxu0 %v335
    %v387 = vpop.f32.mrf.mxu0
    %v388 = vadd.f32 %v310, %v387
    %389 = vmatmul.f32.gmra.mxu0 %v338
    %v390 = vpop.f32.mrf.mxu0
    %v391 = vadd.f32 %v311, %v390
    %392 = vmatmul.f32.gmra.mxu0 %v341
    %v393 = vpop.f32.mrf.mxu0
    %v394 = vadd.f32 %v312, %v393
    %395 = vmatmul.f32.gmra.mxu0 %v344
    %v396 = vpop.f32.mrf.mxu0
    %v397 = vadd.f32 %v313, %v396
    %398 = vmatmul.f32.gmra.mxu0 %v347
    %v399 = vpop.f32.mrf.mxu0
    %v400 = vadd.f32 %v314, %v399
    %401 = vmatmul.f32.gmra.mxu0 %v350
    %v402 = vpop.f32.mrf.mxu0
    %v403 = vadd.f32 %v315, %v402
    %404 = vdwg.mxu0
    %v405 = vld [vmem:[%s9] sm:$0x1]
    %v407 = vperm.slane %v405, 0
    %v409 = vadd.f32 %v370, %v407
    %v410 = vadd.f32 %v373, %v407
    %v411 = vadd.f32 %v376, %v407
    %v412 = vadd.f32 %v379, %v407
    %v413 = vadd.f32 %v382, %v407
    %v414 = vadd.f32 %v385, %v407
    %v415 = vadd.f32 %v388, %v407
    %v416 = vadd.f32 %v391, %v407
    %v417 = vadd.f32 %v394, %v407
    %v418 = vadd.f32 %v397, %v407
    %v419 = vadd.f32 %v400, %v407
    %v420 = vadd.f32 %v403, %v407
    %v421 = vmax.f32 %v409, 0.0
    %v422 = vmax.f32 %v410, 0.0
    %v423 = vmax.f32 %v411, 0.0
    %v424 = vmax.f32 %v412, 0.0
    %v425 = vmax.f32 %v413, 0.0
    %v426 = vmax.f32 %v414, 0.0
    %v427 = vmax.f32 %v415, 0.0
    %v428 = vmax.f32 %v416, 0.0
    %v429 = vmax.f32 %v417, 0.0
    %v430 = vmax.f32 %v418, 0.0
    %v431 = vmax.f32 %v419, 0.0
    %v432 = vmax.f32 %v420, 0.0
    %v433 = vld [vmem:[%s10] sm:$0x1]
    %v435 = vperm.slane %v433, 0
    %v437 = vmul.f32 %v251, %v435
    %v438 = vmul.f32 %v252, %v435
    %v439 = vmul.f32 %v253, %v435
    %v440 = vmul.f32 %v254, %v435
    %v441 = vsel %vm192, %v437, 0.0
    %442 = vadd.xlane.f32.xlu0 %v441
    %v443 = vpop.xlane.xlu0 %442
    %v444 = vsel %vm192, %v438, 0.0
    %445 = vadd.xlane.f32.xlu0 %v444
    %v446 = vpop.xlane.xlu0 %445
    %v447 = vsel %vm192, %v439, 0.0
    %448 = vadd.xlane.f32.xlu0 %v447
    %v449 = vpop.xlane.xlu0 %448
    %v450 = vsel %vm192, %v440, 0.0
    %451 = vadd.xlane.f32.xlu0 %v450
    %v452 = vpop.xlane.xlu0 %451
    %v453 = vld [vmem:[#allocation2] sm:$0x1]
    %v455 = vperm.slane %v453, 0
    %v457 = vadd.f32 %v443, %v455
    %v458 = vadd.f32 %v446, %v455
    %v459 = vadd.f32 %v449, %v455
    %v460 = vadd.f32 %v452, %v455
    %v461 = vmul.f32 %v457, 0.5
    %v462 = vmul.f32 %v458, 0.5
    %v463 = vmul.f32 %v459, 0.5
    %v464 = vmul.f32 %v460, 0.5
    %v465 = vtanh.pop %v461
    %v466 = vtanh.pop %v462
    %v467 = vtanh.pop %v463
    %v468 = vtanh.pop %v464
    %v469 = vadd.f32 %v465, 1.0
    %v470 = vadd.f32 %v466, 1.0
    %v471 = vadd.f32 %v467, 1.0
    %v472 = vadd.f32 %v468, 1.0
    %v473 = vmul.f32 %v469, 0.5
    %v474 = vmul.f32 %v470, 0.5
    %v475 = vmul.f32 %v471, 0.5
    %v476 = vmul.f32 %v472, 0.5
    %v477 = vld [vmem:[%s12] sm:$0x1]
    %v479 = vperm.slane %v477, 0
    %v481 = vmul.f32 %v421, %v479
    %v482 = vmul.f32 %v422, %v479
    %v483 = vmul.f32 %v423, %v479
    %v484 = vmul.f32 %v424, %v479
    %v485 = vmul.f32 %v425, %v479
    %v486 = vmul.f32 %v426, %v479
    %v487 = vmul.f32 %v427, %v479
    %v488 = vmul.f32 %v428, %v479
    %v489 = vmul.f32 %v429, %v479
    %v490 = vmul.f32 %v430, %v479
    %v491 = vmul.f32 %v431, %v479
    %v492 = vmul.f32 %v432, %v479
    %v493 = vsel %vm192, %v481, 0.0
    %494 = vadd.xlane.f32.xlu0 %v493
    %v495 = vpop.xlane.xlu0 %494
    %v496 = vsel %vm192, %v482, 0.0
    %497 = vadd.xlane.f32.xlu0 %v496
    %v498 = vpop.xlane.xlu0 %497
    %v499 = vsel %vm192, %v483, 0.0
    %500 = vadd.xlane.f32.xlu0 %v499
    %v501 = vpop.xlane.xlu0 %500
    %v502 = vsel %vm192, %v484, 0.0
    %503 = vadd.xlane.f32.xlu0 %v502
    %v504 = vpop.xlane.xlu0 %503
    %v505 = vsel %vm192, %v485, 0.0
    %506 = vadd.xlane.f32.xlu0 %v505
    %v507 = vpop.xlane.xlu0 %506
    %v508 = vsel %vm192, %v486, 0.0
    %509 = vadd.xlane.f32.xlu0 %v508
    %v510 = vpop.xlane.xlu0 %509
    %v511 = vsel %vm192, %v487, 0.0
    %512 = vadd.xlane.f32.xlu0 %v511
    %v513 = vpop.xlane.xlu0 %512
    %v514 = vsel %vm192, %v488, 0.0
    %515 = vadd.xlane.f32.xlu0 %v514
    %v516 = vpop.xlane.xlu0 %515
    %v517 = vsel %vm192, %v489, 0.0
    %518 = vadd.xlane.f32.xlu0 %v517
    %v519 = vpop.xlane.xlu0 %518
    %v520 = vsel %vm192, %v490, 0.0
    %521 = vadd.xlane.f32.xlu0 %v520
    %v522 = vpop.xlane.xlu0 %521
    %v523 = vsel %vm192, %v491, 0.0
    %524 = vadd.xlane.f32.xlu0 %v523
    %v525 = vpop.xlane.xlu0 %524
    %v526 = vsel %vm192, %v492, 0.0
    %527 = vadd.xlane.f32.xlu0 %v526
    %v528 = vpop.xlane.xlu0 %527
    %v529 = vld [vmem:[#allocation3] sm:$0x1]
    %v531 = vperm.slane %v529, 0
    %v533 = vadd.f32 %v495, %v531
    %v534 = vadd.f32 %v498, %v531
    %v535 = vadd.f32 %v501, %v531
    %v536 = vadd.f32 %v504, %v531
    %v537 = vadd.f32 %v507, %v531
    %v538 = vadd.f32 %v510, %v531
    %v539 = vadd.f32 %v513, %v531
    %v540 = vadd.f32 %v516, %v531
    %v541 = vadd.f32 %v519, %v531
    %v542 = vadd.f32 %v522, %v531
    %v543 = vadd.f32 %v525, %v531
    %v544 = vadd.f32 %v528, %v531
    %v545 = vmul.f32 %v533, 0.5
    %v546 = vmul.f32 %v534, 0.5
    %v547 = vmul.f32 %v535, 0.5
    %v548 = vmul.f32 %v536, 0.5
    %v549 = vmul.f32 %v537, 0.5
    %v550 = vmul.f32 %v538, 0.5
    %v551 = vmul.f32 %v539, 0.5
    %v552 = vmul.f32 %v540, 0.5
    %v553 = vmul.f32 %v541, 0.5
    %v554 = vmul.f32 %v542, 0.5
    %v555 = vmul.f32 %v543, 0.5
    %v556 = vmul.f32 %v544, 0.5
    %v557 = vtanh.pop %v545
    %v558 = vtanh.pop %v546
    %v559 = vtanh.pop %v547
    %v560 = vtanh.pop %v548
    %v561 = vtanh.pop %v549
    %v562 = vtanh.pop %v550
    %v563 = vtanh.pop %v551
    %v564 = vtanh.pop %v552
    %v565 = vtanh.pop %v553
    %v566 = vtanh.pop %v554
    %v567 = vtanh.pop %v555
    %v568 = vtanh.pop %v556
    %v569 = vadd.f32 %v557, 1.0
    %v570 = vadd.f32 %v558, 1.0
    %v571 = vadd.f32 %v559, 1.0
    %v572 = vadd.f32 %v560, 1.0
    %v573 = vadd.f32 %v561, 1.0
    %v574 = vadd.f32 %v562, 1.0
    %v575 = vadd.f32 %v563, 1.0
    %v576 = vadd.f32 %v564, 1.0
    %v577 = vadd.f32 %v565, 1.0
    %v578 = vadd.f32 %v566, 1.0
    %v579 = vadd.f32 %v567, 1.0
    %v580 = vadd.f32 %v568, 1.0
    %v581 = vmul.f32 %v569, 0.5
    %v582 = vmul.f32 %v570, 0.5
    %v583 = vmul.f32 %v571, 0.5
    %v584 = vmul.f32 %v572, 0.5
    %v585 = vmul.f32 %v573, 0.5
    %v586 = vmul.f32 %v574, 0.5
    %v587 = vmul.f32 %v575, 0.5
    %v588 = vmul.f32 %v576, 0.5
    %v589 = vmul.f32 %v577, 0.5
    %v590 = vmul.f32 %v578, 0.5
    %v591 = vmul.f32 %v579, 0.5
    %v592 = vmul.f32 %v580, 0.5
    %594 = vset.pattern.permute.xlu0 0
    %595 = vperm.xlu0 %594, %v473
    %v596 = vpop.permute.xlu0 %595
    %599 = vset.pattern.permute.xlu0 0
    %600 = vperm.xlu0 %599, %v474
    %v601 = vpop.permute.xlu0 %600
    %604 = vset.pattern.permute.xlu0 0
    %605 = vperm.xlu0 %604, %v475
    %v606 = vpop.permute.xlu0 %605
    %609 = vset.pattern.permute.xlu0 0
    %610 = vperm.xlu0 %609, %v476
    %v611 = vpop.permute.xlu0 %610
    %v613 = vmul.f32 %v596, %v251
    %v614 = vmul.f32 %v601, %v252
    %v615 = vmul.f32 %v606, %v253
    %v616 = vmul.f32 %v611, %v254
    %618 = vset.pattern.permute.xlu0 0
    %619 = vperm.xlu0 %618, %v581
    %v620 = vpop.permute.xlu0 %619
    %623 = vset.pattern.permute.xlu0 0
    %624 = vperm.xlu0 %623, %v582
    %v625 = vpop.permute.xlu0 %624
    %628 = vset.pattern.permute.xlu0 0
    %629 = vperm.xlu0 %628, %v583
    %v630 = vpop.permute.xlu0 %629
    %633 = vset.pattern.permute.xlu0 0
    %634 = vperm.xlu0 %633, %v584
    %v635 = vpop.permute.xlu0 %634
    %638 = vset.pattern.permute.xlu0 0
    %639 = vperm.xlu0 %638, %v585
    %v640 = vpop.permute.xlu0 %639
    %643 = vset.pattern.permute.xlu0 0
    %644 = vperm.xlu0 %643, %v586
    %v645 = vpop.permute.xlu0 %644
    %648 = vset.pattern.permute.xlu0 0
    %649 = vperm.xlu0 %648, %v587
    %v650 = vpop.permute.xlu0 %649
    %653 = vset.pattern.permute.xlu0 0
    %654 = vperm.xlu0 %653, %v588
    %v655 = vpop.permute.xlu0 %654
    %658 = vset.pattern.permute.xlu0 0
    %659 = vperm.xlu0 %658, %v589
    %v660 = vpop.permute.xlu0 %659
    %663 = vset.pattern.permute.xlu0 0
    %664 = vperm.xlu0 %663, %v590
    %v665 = vpop.permute.xlu0 %664
    %668 = vset.pattern.permute.xlu0 0
    %669 = vperm.xlu0 %668, %v591
    %v670 = vpop.permute.xlu0 %669
    %673 = vset.pattern.permute.xlu0 0
    %674 = vperm.xlu0 %673, %v592
    %v675 = vpop.permute.xlu0 %674
    %v677 = vmul.f32 %v620, %v421
    %v678 = vmul.f32 %v625, %v422
    %v679 = vmul.f32 %v630, %v423
    %v680 = vmul.f32 %v635, %v424
    %v681 = vmul.f32 %v640, %v425
    %v682 = vmul.f32 %v645, %v426
    %v683 = vmul.f32 %v650, %v427
    %v684 = vmul.f32 %v655, %v428
    %v685 = vmul.f32 %v660, %v429
    %v686 = vmul.f32 %v665, %v430
    %v687 = vmul.f32 %v670, %v431
    %v688 = vmul.f32 %v675, %v432
    %693 = vrot.lane.b32.xlu0 %v677, 32
    %v694 = vpop.permute.xlu0 %693
    %695 = vrot.lane.b32.xlu0 %v678, 32
    %v696 = vpop.permute.xlu0 %695
    %697 = vrot.lane.b32.xlu0 %v679, 32
    %v698 = vpop.permute.xlu0 %697
    %699 = vrot.lane.b32.xlu0 %v680, 32
    %v700 = vpop.permute.xlu0 %699
    %709 = vrot.lane.b32.xlu0 %v681, 64
    %v710 = vpop.permute.xlu0 %709
    %711 = vrot.lane.b32.xlu0 %v682, 64
    %v712 = vpop.permute.xlu0 %711
    %713 = vrot.lane.b32.xlu0 %v683, 64
    %v714 = vpop.permute.xlu0 %713
    %715 = vrot.lane.b32.xlu0 %v684, 64
    %v716 = vpop.permute.xlu0 %715
    %725 = vrot.lane.b32.xlu0 %v685, 96
    %v726 = vpop.permute.xlu0 %725
    %727 = vrot.lane.b32.xlu0 %v686, 96
    %v728 = vpop.permute.xlu0 %727
    %729 = vrot.lane.b32.xlu0 %v687, 96
    %v730 = vpop.permute.xlu0 %729
    %731 = vrot.lane.b32.xlu0 %v688, 96
    %v732 = vpop.permute.xlu0 %731
    %v737 = vsel %vm192, %v613, %v694
    %v738 = vsel %vm192, %v614, %v696
    %v739 = vsel %vm192, %v615, %v698
    %v740 = vsel %vm192, %v616, %v700
    %v741 = vsel %vm209, %v737, %v710
    %v742 = vsel %vm209, %v738, %v712
    %v743 = vsel %vm209, %v739, %v714
    %v744 = vsel %vm209, %v740, %v716
    %vm745 = vcmask 785408
    %v746 = vsel %vm745, %v741, %v726
    %v747 = vsel %vm745, %v742, %v728
    %v748 = vsel %vm745, %v743, %v730
    %v749 = vsel %vm745, %v744, %v732
    %v750 = vld [vmem:[%s4] sm:$0x1]
    %v751 = vlaneseq
    %v752 = vshrl.u32 %v751, 7
    %v753 = vperm.slane %v750, 0
    %vm754 = vcmp.eq.s32.totalorder %v752, %v753
    %v755 = vsel %vm754, 1, 0
    %v756 = vcvt.s32.f32 %v755
    %v758 = vsel %vm192, %v756, 0
    %760 = vmatpush.msra.mxu0 0.0
    %761 = vmatpush.msra.mxu0 0.0
    %762 = vmatpush.msra.mxu0 0.0
    %763 = vmatpush.msra.mxu0 0.0
    %764 = vmatpush.msra.mxu0 0.0
    %765 = vmatpush.msra.mxu0 0.0
    %766 = vmatpush.msra.mxu0 0.0
    %767 = vmatpush.msra.mxu0 0.0
    %768 = vmatpush.msra.mxu0 0.0
    %769 = vmatpush.msra.mxu0 0.0
    %770 = vmatpush.msra.mxu0 0.0
    %771 = vmatpush.msra.mxu0 0.0
    %772 = vmatpush.msra.mxu0 %v749
    %773 = vmatpush.msra.mxu0 %v748
    %774 = vmatpush.msra.mxu0 %v747
    %775 = vmatpush.msra.mxu0 %v746
    %776 = vmatmul.f32.gmra.mxu0 %v758
    %v777 = vpop.f32.mrf.mxu0
    %v778 = vadd.f32 0.0, %v777
    %779 = vdwg.mxu0
    %v780 = vld [vmem:[%s14] sm:$0xff]
    %v781 = vld [vmem:[%s14 + $0x8] sm:$0xff]
    %v782 = vld [vmem:[%s14 + $0x10] sm:$0xff]
    %v783 = vld [vmem:[%s14 + $0x18] sm:$0xff]
    %v784 = vld [vmem:[%s14 + $0x20] sm:$0xff]
    %v785 = vld [vmem:[%s14 + $0x28] sm:$0xff]
    %v786 = vld [vmem:[%s14 + $0x30] sm:$0xff]
    %v787 = vld [vmem:[%s14 + $0x38] sm:$0xff]
    %v788 = vld [vmem:[%s14 + $0x40] sm:$0xff]
    %v789 = vld [vmem:[%s14 + $0x48] sm:$0xff]
    %v790 = vld [vmem:[%s14 + $0x50] sm:$0xff]
    %v791 = vld [vmem:[%s14 + $0x58] sm:$0xff]
    %v792 = vld [vmem:[%s14 + $0x60] sm:$0xff]
    %v793 = vld [vmem:[%s14 + $0x68] sm:$0xff]
    %v794 = vld [vmem:[%s14 + $0x70] sm:$0xff]
    %v795 = vld [vmem:[%s14 + $0x78] sm:$0xff]
    %v796 = vld [vmem:[%s15] sm:$0x1]
    %v798 = vperm.slane %v796, 0
    %800 = vmatpush.msra.mxu0 %v795
    %801 = vmatpush.msra.mxu0 %v794
    %802 = vmatpush.msra.mxu0 %v793
    %803 = vmatpush.msra.mxu0 %v792
    %804 = vmatpush.msra.mxu0 %v791
    %805 = vmatpush.msra.mxu0 %v790
    %806 = vmatpush.msra.mxu0 %v789
    %807 = vmatpush.msra.mxu0 %v788
    %808 = vmatpush.msra.mxu0 %v787
    %809 = vmatpush.msra.mxu0 %v786
    %810 = vmatpush.msra.mxu0 %v785
    %811 = vmatpush.msra.mxu0 %v784
    %812 = vmatpush.msra.mxu0 %v783
    %813 = vmatpush.msra.mxu0 %v782
    %814 = vmatpush.msra.mxu0 %v781
    %815 = vmatpush.msra.mxu0 %v780
    %816 = vmatmul.f32.gmra.mxu0 %v778
    %v817 = vpop.f32.mrf.mxu0
    %v818 = vadd.f32 %v798, %v817
    %819 = vdwg.mxu0
    %v820 = vmax.f32 %v818, 0.0
    %v821 = vld [vmem:[%s16] sm:$0xff]
    %v822 = vld [vmem:[%s16 + $0x8] sm:$0xff]
    %v823 = vld [vmem:[%s16 + $0x10] sm:$0xff]
    %v824 = vld [vmem:[%s16 + $0x18] sm:$0xff]
    %v825 = vld [vmem:[%s17] sm:$0x1]
    %v827 = vperm.slane %v825, 0
    %v830 = vsel %vm192, %v820, 0
    %832 = vmatpush.msra.mxu0 0.0
    %833 = vmatpush.msra.mxu0 0.0
    %834 = vmatpush.msra.mxu0 0.0
    %835 = vmatpush.msra.mxu0 0.0
    %836 = vmatpush.msra.mxu0 0.0
    %837 = vmatpush.msra.mxu0 0.0
    %838 = vmatpush.msra.mxu0 0.0
    %839 = vmatpush.msra.mxu0 0.0
    %840 = vmatpush.msra.mxu0 0.0
    %841 = vmatpush.msra.mxu0 0.0
    %842 = vmatpush.msra.mxu0 0.0
    %843 = vmatpush.msra.mxu0 0.0
    %844 = vmatpush.msra.mxu0 %v824
    %845 = vmatpush.msra.mxu0 %v823
    %846 = vmatpush.msra.mxu0 %v822
    %847 = vmatpush.msra.mxu0 %v821
    %848 = vmatmul.f32.gmra.mxu0 %v830
    %v849 = vpop.f32.mrf.mxu0
    %v850 = vadd.f32 %v827, %v849
    %851 = vdwg.mxu0
    %852 = vst [vmem:[#allocation4] sm:$0xff] %v850
    // Predicated region
    $region74: #{tpu_custom_call.1} parent=1 // pred_check
      _
    $region75: #{tpu_custom_call.1} parent=1 // pred_check_branch
      %854 = sbr.rel (0) target = $region77
    $region76: #{tpu_custom_call.1} parent=1 // pred_region
      %856 = vsyncadd [#allocation5], 0
      %s858 = sshll.u32 [#allocation4], 4
      %s859 = int_to_ptr.vmem [resolvable:$true] %s858
      %s860 = sshll.u32 %s18, 4
      %s861 = int_to_ptr.hbm [resolvable:$true] %s860
      %863 = dma.vmem_to_hbm [thread:$0]  %s859, 128, %s861, [#allocation5]
    $region77: #{tpu_custom_call.1} parent=1 // pred_fallthru
      _
    // Predicated region
    $region78: #{tpu_custom_call.1} parent=1 // pred_check
      _
    $region79: #{tpu_custom_call.1} parent=1 // pred_check_branch
      %865 = sbr.rel (0) target = $region81
    $region80: #{tpu_custom_call.1} parent=1 // pred_region
      %867 = dma.done [#allocation5], 128
    $region81: #{tpu_custom_call.1} parent=1 // pred_fallthru
      _
    %868 = vsyncpa [#allocation5], 1

</llo_original>
